<compile_context>
chip_gen: v7x
topology: tpu7x:2x2x1
jax: 0.10.0
libtpu: 0.0.40
codegen_flags: <defaults>
</compile_context>

<pallas_src>
import jax
import jax.numpy as jnp
from jax.experimental import pallas as pl
from jax.experimental.pallas import tpu as pltpu


def _inject_noise_kernel(x_ref, n_ref, w_ref, o_ref):
    # Block shapes: x/o -> (D, THW), noise -> (1, THW), weight -> (D, 1)
    x = x_ref[...].astype(jnp.float32)
    n = n_ref[...].astype(jnp.float32)
    w = w_ref[...].astype(jnp.float32)
    # (1, THW) * (D, 1) broadcasts to (D, THW): one fused VPU mul+add per vreg.
    o_ref[...] = (x + n * w).astype(o_ref.dtype)


def _pick_hw_tile(hw, d, itemsize, budget=2 * 1024 * 1024):
    """Lane-dense tile along the flattened H*W axis (multiple of 128)."""
    if hw <= 128 or hw * d * itemsize <= budget:
        return hw
    t = max(128, min(hw, (budget // (d * itemsize)) // 128 * 128))
    # Prefer an exact divisor (no masked edge block), but never shrink below
    # half the budgeted tile just to find one.
    cand = t
    while cand >= max(128, t // 2):
        if hw % cand == 0:
            return cand
        cand -= 128
    return t


def inject_noise(x, weight, noise):
    """InjectNoise forward with explicit noise.

    x:      (B, D, H, W)
    weight: (1, D, 1, 1) or (D,)   -- the module's learned per-channel scale
    noise:  (B, 1, H, W)           -- standard-normal noise (torch.randn equivalent)
    returns (B, D, H, W) = x + noise * weight
    """
    b, d, h, w = x.shape
    hw = h * w

    x3 = x.reshape(b, d, hw)           # lane axis = flattened H*W (lane-dense)
    n3 = noise.reshape(b, 1, hw)
    w2 = jnp.asarray(weight).reshape(d, 1)

    thw = _pick_hw_tile(hw, d, x.dtype.itemsize)
    grid = (b, pl.cdiv(hw, thw))

    out = pl.pallas_call(
        _inject_noise_kernel,
        out_shape=jax.ShapeDtypeStruct((b, d, hw), x.dtype),
        grid=grid,
        in_specs=[
            pl.BlockSpec((None, d, thw), lambda i, j: (i, 0, j)),   # x
            pl.BlockSpec((None, 1, thw), lambda i, j: (i, 0, j)),   # noise
            pl.BlockSpec((d, 1), lambda i, j: (0, 0)),              # weight (tiny, grid-invariant)
        ],
        out_specs=pl.BlockSpec((None, d, thw), lambda i, j: (i, 0, j)),
        compiler_params=pltpu.CompilerParams(
            dimension_semantics=("parallel", "parallel"),
            vmem_limit_bytes=32 * 1024 * 1024,
        ),
    )(x3, n3, w2)

    return out.reshape(b, d, h, w)


def inject_noise_random(x, weight, key):
    """Module-faithful API: draws the noise internally (like torch.randn)."""
    # TODO(synk): torch.randn's stateful global RNG has no functional analogue;
    # noise is drawn from an explicit JAX key instead (same distribution).
    b, _, h, w = x.shape
    noise = jax.random.normal(key, (b, 1, h, w), dtype=x.dtype)
    return inject_noise(x, weight, noise)


if __name__ == "__main__":
    # Small shapes implied by the module: (batch, channels, H, W).
    B, D, H, W = 2, 4, 16, 16

    key = jax.random.PRNGKey(0)
    kx, kn, kw = jax.random.split(key, 3)

    x = jax.random.normal(kx, (B, D, H, W), dtype=jnp.float32)
    noise = jax.random.normal(kn, (B, 1, H, W), dtype=jnp.float32)
    # Use a nonzero weight so the noise path is actually exercised
    # (the module itself initializes w to zeros).
    weight = 0.1 * jax.random.normal(kw, (1, D, 1, 1), dtype=jnp.float32)

    out = inject_noise(x, weight, noise)
    out = jax.block_until_ready(out)

    # Reference: x + noise * w with numpy-style broadcasting, exactly as torch does.
    ref = x + noise * weight
    assert out.shape == (B, D, H, W)
    assert jnp.allclose(out, ref, atol=1e-6, rtol=1e-6)

    # With the module's actual init (w = zeros) the op is an exact identity.
    out0 = inject_noise(x, jnp.zeros((1, D, 1, 1), jnp.float32), noise)
    out0 = jax.block_until_ready(out0)
    assert jnp.array_equal(out0, x)

    # Module-faithful path (noise drawn internally) also runs cleanly.
    out_r = jax.block_until_ready(inject_noise_random(x, weight, kn))
    assert out_r.shape == (B, D, H, W)

    print("KERNEL_OK")
</pallas_src>

<mosaic_0001>
module attributes {stable_mosaic.version = 11 : i64} {
  func.func @_inject_noise_kernel(%arg0: i32, %arg1: i32, %arg2: memref<1x4x256xf32, #tpu.memory_space<vmem>>, %arg3: memref<1x1x256xf32, #tpu.memory_space<vmem>>, %arg4: memref<4x1xf32, #tpu.memory_space<vmem>>, %arg5: memref<1x4x256xf32, #tpu.memory_space<vmem>>) attributes {dimension_semantics = [#tpu.dimension_semantics<parallel>, #tpu.dimension_semantics<parallel>], iteration_bounds = array<i64: 2, 1>, scalar_prefetch = 0 : i64, scratch_operands = 0 : i64, tpu.core_type = #tpu.core_type<tc>, window_params = [{transform_indices = @transform_0, window_bounds = array<i64: 1, 4, 256>}, {transform_indices = @transform_1, window_bounds = array<i64: 1, 1, 256>}, {pipeline_mode = #tpu.pipeline_mode<synchronous>, transform_indices = @transform_2, window_bounds = array<i64: 4, 1>}, {transform_indices = @transform_3, window_bounds = array<i64: 1, 4, 256>}]} {
    %c0 = arith.constant 0 : index
    %c0_0 = arith.constant 0 : index
    %c0_1 = arith.constant 0 : index
    %0 = vector.load %arg2[%c0, %c0_0, %c0_1] : memref<1x4x256xf32, #tpu.memory_space<vmem>>, vector<1x4x256xf32>
    %1 = vector.shape_cast %0 : vector<1x4x256xf32> to vector<4x256xf32>
    %c0_2 = arith.constant 0 : index
    %c0_3 = arith.constant 0 : index
    %c0_4 = arith.constant 0 : index
    %2 = vector.load %arg3[%c0_2, %c0_3, %c0_4] : memref<1x1x256xf32, #tpu.memory_space<vmem>>, vector<1x1x256xf32>
    %3 = vector.shape_cast %2 : vector<1x1x256xf32> to vector<1x256xf32>
    %c0_5 = arith.constant 0 : index
    %c0_6 = arith.constant 0 : index
    %4 = vector.load %arg4[%c0_5, %c0_6] : memref<4x1xf32, #tpu.memory_space<vmem>>, vector<4x1xf32>
    %5 = vector.broadcast %3 : vector<1x256xf32> to vector<4x256xf32>
    %6 = vector.broadcast %4 : vector<4x1xf32> to vector<4x256xf32>
    %7 = arith.mulf %5, %6 : vector<4x256xf32>
    %8 = arith.addf %1, %7 : vector<4x256xf32>
    %c0_7 = arith.constant 0 : index
    %c0_8 = arith.constant 0 : index
    %c0_9 = arith.constant 0 : index
    %9 = vector.load %arg5[%c0_7, %c0_8, %c0_9] : memref<1x4x256xf32, #tpu.memory_space<vmem>>, vector<1x4x256xf32>
    %10 = vector.shape_cast %9 : vector<1x4x256xf32> to vector<4x256xf32>
    %11 = vector.shape_cast %8 : vector<4x256xf32> to vector<1x4x256xf32>
    tpu.vector_store %arg5[%c0_7, %c0_8, %c0_9], %11 {strides = array<i32>} : memref<1x4x256xf32, #tpu.memory_space<vmem>>, vector<1x4x256xf32>,
    return
  }
  func.func @transform_0(%arg0: i32, %arg1: i32) -> (i32, i32, i32) {
    %c0_i32 = arith.constant 0 : i32
    %c0_i32_0 = arith.constant 0 : i32
    return %arg0, %c0_i32, %arg1 : i32, i32, i32
  }
  func.func @transform_1(%arg0: i32, %arg1: i32) -> (i32, i32, i32) {
    %c0_i32 = arith.constant 0 : i32
    %c0_i32_0 = arith.constant 0 : i32
    return %arg0, %c0_i32, %arg1 : i32, i32, i32
  }
  func.func @transform_2(%arg0: i32, %arg1: i32) -> (i32, i32) {
    %c0_i32 = arith.constant 0 : i32
    %c0_i32_0 = arith.constant 0 : i32
    %c0_i32_1 = arith.constant 0 : i32
    return %c0_i32, %c0_i32_0 : i32, i32
  }
  func.func @transform_3(%arg0: i32, %arg1: i32) -> (i32, i32, i32) {
    %c0_i32 = arith.constant 0 : i32
    %c0_i32_0 = arith.constant 0 : i32
    return %arg0, %c0_i32, %arg1 : i32, i32, i32
  }
}

</mosaic_0001>

<llo_original>
// kernel: tpu_custom_call.1
$region0: #{tpu_custom_call.1}
  #allocation0 [shape = 'u32[]', space=smem, size = 0x4, offset = 0x4, fixed_abs, tag = 'smem constant byte address 0x4 - core index']
  #allocation1 [shape = 'u32[144,128]{1,0:T(1,128)}', space=vmem, size = 0x12000, scoped, tag = 'internal scratch']
  %s0 = inlined_call_operand.hbm [shape: f32[2,4,256], index: 0, kind: input, shape index: {}]
  %s1 = inlined_call_operand.vmem [shape: f32[2,1,256], index: 1, kind: input, shape index: {}]
  %s2 = inlined_call_operand.vmem [shape: f32[4,1], index: 2, kind: input, shape index: {}]
  %s3 = inlined_call_operand.hbm [shape: f32[2,4,256], index: 3, kind: output, shape index: {}]
  %s4 = sld [smem:[#allocation0]]
  $region49: #{tpu_custom_call.1} parent=0
    _
  %s6 = ssub.s32 1, %s4
  %s7 = scalar_select 0, %s6, %s4
  $region1: #{tpu_custom_call.1} parent=0
    #allocation2 [shape = 'u8[8192]{0}', space=vmem, size = 0x2000, scoped, tag = 'input window, operand 0']
    #allocation3 [shape = 's32[2]{0}', space=sflag, size = 0x8, scoped, tag = 'scoped memory for tpu_custom_call.1']
    #allocation4 [shape = 's32[2]{0}', space=sflag, size = 0x8, scoped, tag = 'scoped memory for tpu_custom_call.1']
    #allocation5 [shape = 'u8[8192]{0}', space=vmem, size = 0x2000, scoped, tag = 'output window, operand 0']
    %8 = vsyncpa [#allocation3], 0
    %s9 = scalar_lea.sflag [#allocation3], 1
    %10 = vsyncpa %s9, 0
    %11 = vsyncpa [#allocation4], 0
    %s12 = scalar_lea.sflag [#allocation4], 1
    %13 = vsyncpa %s12, 0
    loop: start=0, step=1, limit=4
    $region2: #{tpu_custom_call.1} parent=1 // loop_pre_header
      _
    $region3: #{tpu_custom_call.1} parent=1 // loop_header
      %s15 = sphi 0, %s19
      %p16 = scmp.ge.s32.totalorder %s15, 4
      %s22 = sphi 0, %s34
      %s23 = sphi 0, %s30
      %s24 = sphi 0, %s22
      %s25 = sphi 0, %s23
      %s26 = sphi 0, %s24
      %s27 = sphi 0, %s25
      %s39 = sphi 0, %s41
      %s42 = sphi 0, %s39
      %s43 = sphi 0, %s42
      %s59 = sphi 0, %s43
      %s67 = sphi 0, %s69
      %s70 = sphi 0, %s67
      %s71 = sphi 0, %s70
      %s87 = sphi 0, %s71
      %s91 = sphi 0, %s91
      %s93 = sphi 0, %s91
      %s94 = sphi 0, %s93
      %s108 = sphi 0, %s94
      %s116 = sphi 0, %s118
      %s119 = sphi 0, %s116
      %s120 = sphi 0, %s119
      %s136 = sphi 0, %s120
    $region4: #{tpu_custom_call.1} parent=1 // loop_header_branch
      %18 = sbr.rel (%p16) target = $region8
    $region5: #{tpu_custom_call.1} parent=1 // loop_body
      %s20 = ssub.s32 %s15, 1
      %s21 = ssub.s32 %s15, 2
      %s28 = sadd.s32 1, %s23
      %p29 = scmp.ge.s32.totalorder %s28, 1
      %s30 = scalar_select %p29, 0, %s28
      %s31 = sadd.s32 1, %s22
      %s32 = scalar_select %p29, %s31, %s22
      %p33 = scmp.ge.s32.totalorder %s32, 2
      %s34 = scalar_select %p33, 0, %s32
      %s35 = ssub.s32 %s22, %s34
      %s36 = ssub.s32 %s23, %s30
      %s37 = sor.u32 %s35, %s36
      %p38 = scmp.eq.s32.totalorder %s37, 0
      %s40 = sadd.s32 %s39, 1
      %s41 = scalar_select %p38, %s39, %s40
      %p44 = pneg %p38
      %p45 = scmp.eq.s32.totalorder %s15, 1
      %p46 = por %p44, %p45
      %p47 = scmp.ne.s32.totalorder %s39, %s42
      %p48 = scmp.eq.s32.totalorder %s15, 0
      %p49 = por %p47, %p48
      %p50 = scmp.ne.s32.totalorder %s39, %s42
      %p51 = scmp.eq.s32.totalorder %s20, 1
      %p52 = por %p50, %p51
      %p53 = scmp.ne.s32.totalorder %s42, %s43
      %p54 = scmp.eq.s32.totalorder %s20, 0
      %p55 = por %p53, %p54
      %p56 = scmp.ne.s32.totalorder %s42, %s43
      %p57 = scmp.eq.s32.totalorder %s21, 1
      %p58 = por %p56, %p57
      %p60 = scmp.ne.s32.totalorder %s43, %s59
      %p61 = scmp.eq.s32.totalorder %s21, 0
      %p62 = por %p60, %p61
      %s63 = ssub.s32 %s22, %s34
      %s64 = ssub.s32 %s23, %s30
      %s65 = sor.u32 %s63, %s64
      %p66 = scmp.eq.s32.totalorder %s65, 0
      %s68 = sadd.s32 %s67, 1
      %s69 = scalar_select %p66, %s67, %s68
      %p72 = pneg %p66
      %p73 = scmp.eq.s32.totalorder %s15, 1
      %p74 = por %p72, %p73
      %p75 = scmp.ne.s32.totalorder %s67, %s70
      %p76 = scmp.eq.s32.totalorder %s15, 0
      %p77 = por %p75, %p76
      %p78 = scmp.ne.s32.totalorder %s67, %s70
      %p79 = scmp.eq.s32.totalorder %s20, 1
      %p80 = por %p78, %p79
      %p81 = scmp.ne.s32.totalorder %s70, %s71
      %p82 = scmp.eq.s32.totalorder %s20, 0
      %p83 = por %p81, %p82
      %p84 = scmp.ne.s32.totalorder %s70, %s71
      %p85 = scmp.eq.s32.totalorder %s21, 1
      %p86 = por %p84, %p85
      %p88 = scmp.ne.s32.totalorder %s71, %s87
      %p89 = scmp.eq.s32.totalorder %s21, 0
      %p90 = por %p88, %p89
      %s92 = sadd.s32 %s91, 1
      %p95 = scmp.eq.s32.totalorder %s15, 1
      %p96 = scmp.ne.s32.totalorder %s91, %s93
      %p97 = scmp.eq.s32.totalorder %s15, 0
      %p98 = por %p96, %p97
      %p99 = scmp.ne.s32.totalorder %s91, %s93
      %p100 = scmp.eq.s32.totalorder %s20, 1
      %p101 = por %p99, %p100
      %p102 = scmp.ne.s32.totalorder %s93, %s94
      %p103 = scmp.eq.s32.totalorder %s20, 0
      %p104 = por %p102, %p103
      %p105 = scmp.ne.s32.totalorder %s93, %s94
      %p106 = scmp.eq.s32.totalorder %s21, 1
      %p107 = por %p105, %p106
      %p109 = scmp.ne.s32.totalorder %s94, %s108
      %p110 = scmp.eq.s32.totalorder %s21, 0
      %p111 = por %p109, %p110
      %s112 = ssub.s32 %s22, %s34
      %s113 = ssub.s32 %s23, %s30
      %s114 = sor.u32 %s112, %s113
      %p115 = scmp.eq.s32.totalorder %s114, 0
      %s117 = sadd.s32 %s116, 1
      %s118 = scalar_select %p115, %s116, %s117
      %p121 = pneg %p115
      %p122 = scmp.eq.s32.totalorder %s15, 1
      %p123 = por %p121, %p122
      %p124 = scmp.ne.s32.totalorder %s116, %s119
      %p125 = scmp.eq.s32.totalorder %s15, 0
      %p126 = por %p124, %p125
      %p127 = scmp.ne.s32.totalorder %s116, %s119
      %p128 = scmp.eq.s32.totalorder %s20, 1
      %p129 = por %p127, %p128
      %p130 = scmp.ne.s32.totalorder %s119, %s120
      %p131 = scmp.eq.s32.totalorder %s20, 0
      %p132 = por %p130, %p131
      %p133 = scmp.ne.s32.totalorder %s119, %s120
      %p134 = scmp.eq.s32.totalorder %s21, 1
      %p135 = por %p133, %p134
      %p137 = scmp.ne.s32.totalorder %s120, %s136
      %p138 = scmp.eq.s32.totalorder %s21, 0
      %p139 = por %p137, %p138
      %p140 = scmp.le.s32.totalorder 1, %s15
      %p141 = scmp.lt.s32.totalorder %s15, 3
      %p142 = pnand %p140, %p141
      %p143 = pneg %p142
      // Predicated region
      $region9: #{tpu_custom_call.1} parent=5 // pred_check
        _
      $region10: #{tpu_custom_call.1} parent=5 // pred_check_branch
        %145 = sbr.rel (%p142) target = $region12
      $region11: #{tpu_custom_call.1} parent=5 // pred_region
        %s146 = ssub.s32 %s15, 1
        // Predicated region
        $region13: #{tpu_custom_call.1} parent=11 // pred_check
          %p147 = pneg %p104
        $region14: #{tpu_custom_call.1} parent=11 // pred_check_branch
          %149 = sbr.rel (%p147) target = $region16
        $region15: #{tpu_custom_call.1} parent=11 // pred_region
          _
        $region16: #{tpu_custom_call.1} parent=11 // pred_fallthru
          _
      $region12: #{tpu_custom_call.1} parent=5 // pred_fallthru
        _
      %p150 = scmp.lt.s32.totalorder %s15, 2
      // Predicated region
      $region17: #{tpu_custom_call.1} parent=5 // pred_check
        %p151 = pneg %p150
      $region18: #{tpu_custom_call.1} parent=5 // pred_check_branch
        %153 = sbr.rel (%p151) target = $region20
      $region19: #{tpu_custom_call.1} parent=5 // pred_region
        // Predicated region
        $region21: #{tpu_custom_call.1} parent=19 // pred_check
          %p154 = pneg %p49
        $region22: #{tpu_custom_call.1} parent=19 // pred_check_branch
          %156 = sbr.rel (%p154) target = $region24
        $region23: #{tpu_custom_call.1} parent=19 // pred_region
          %s157 = sand.u32 %s39, 1
          %s158 = scalar_lea.sflag [#allocation3], %s157
          %s159 = sand.u32 %s39, 1
          %s160 = smul.addr %s159, 8
          %s161 = scalar_lea.vmem [#allocation2], %s160
          %s162 = smul.u32 2, %s23
          %s164 = ssub.s32 128, 128
          %165 = vsyncadd %s158, %s164
          %s166 = smul.addr %s22, 2
          %s167 = sadd.s32 %s162, %s166
          %s168 = smul.addr %s167, 64
          %s169 = scalar_lea.hbm %s0, %s168
          %s171 = sshll.u32 %s161, 4
          %s172 = int_to_ptr.vmem [resolvable:$true] %s171
          %174 = dma.hbm_to_vmem [thread:$0]  %s169, 128, %s172, %s158
        $region24: #{tpu_custom_call.1} parent=19 // pred_fallthru
          _
        // Predicated region
        $region25: #{tpu_custom_call.1} parent=19 // pred_check
          %p175 = pneg %p77
        $region26: #{tpu_custom_call.1} parent=19 // pred_check_branch
          %177 = sbr.rel (%p175) target = $region28
        $region27: #{tpu_custom_call.1} parent=19 // pred_region
          %s178 = smul.u32 2, %s23
          %p179 = scmp.lt.s32.totalorder %s22, 1
          %s180 = scalar_select %p179, %s22, 1
          %p181 = scmp.lt.s32.totalorder %s178, 1
          %s182 = scalar_select %p181, %s178, 1
          %s183 = smul.addr %s180, 2
          %s184 = sadd.s32 %s182, %s183
          %s185 = scalar_lea.vmem %s1, %s184
          %s186 = smul.u32 2, %s23
        $region28: #{tpu_custom_call.1} parent=19 // pred_fallthru
          _
      $region20: #{tpu_custom_call.1} parent=5 // pred_fallthru
        _
      %p187 = scmp.le.s32.totalorder 1, %s15
      %p188 = scmp.lt.s32.totalorder %s15, 3
      %p189 = pnand %p187, %p188
      %p190 = pneg %p189
      // Predicated region
      $region29: #{tpu_custom_call.1} parent=5 // pred_check
        _
      $region30: #{tpu_custom_call.1} parent=5 // pred_check_branch
        %192 = sbr.rel (%p189) target = $region32
      $region31: #{tpu_custom_call.1} parent=5 // pred_region
        %s193 = ssub.s32 %s15, 1
        %s194 = sand.u32 %s42, 1
        %s195 = scalar_lea.sflag [#allocation3], %s194
        %s196 = sand.u32 %s42, 1
        %s197 = smul.addr %s196, 8
        %s198 = scalar_lea.vmem [#allocation2], %s197
        // Predicated region
        $region33: #{tpu_custom_call.1} parent=31 // pred_check
          %p199 = pneg %p55
        $region34: #{tpu_custom_call.1} parent=31 // pred_check_branch
          %201 = sbr.rel (%p199) target = $region36
        $region35: #{tpu_custom_call.1} parent=31 // pred_region
          %202 = dma.done %s195, 128
        $region36: #{tpu_custom_call.1} parent=31 // pred_fallthru
          _
        %s203 = sand.u32 %s42, 1
        %s204 = scalar_lea.sflag [#allocation3], %s203
        %s205 = sand.u32 %s42, 1
        %s206 = smul.addr %s205, 8
        %s207 = scalar_lea.vmem [#allocation2], %s206
        %p208 = pneg %p55
        %p209 = pneg %p52
        %s210 = smul.u32 2, %s25
        %p211 = scmp.lt.s32.totalorder %s24, 1
        %s212 = scalar_select %p211, %s24, 1
        %p213 = scmp.lt.s32.totalorder %s210, 1
        %s214 = scalar_select %p213, %s210, 1
        %s215 = smul.addr %s212, 2
        %s216 = sadd.s32 %s214, %s215
        %s217 = scalar_lea.vmem %s1, %s216
        %p218 = pneg %p83
        %p219 = pneg %p80
        %p220 = pneg %p104
        %p221 = pneg %p101
        %p222 = pneg %p132
        %p223 = pneg %p129
        %s224 = sand.u32 %s119, 1
        %s225 = scalar_lea.sflag [#allocation4], %s224
        %s226 = sand.u32 %s119, 1
        %s227 = smul.addr %s226, 8
        %s228 = scalar_lea.vmem [#allocation5], %s227
        %s229 = smul.u32 2, %s25
        %s230 = smul.u32 2, %s25
        %p231 = scmp.lt.s32.totalorder %s24, 1
        %s232 = scalar_select %p231, %s24, 1
        %p233 = scmp.lt.s32.totalorder %s230, 1
        %s234 = scalar_select %p233, %s230, 1
        %s235 = smul.addr %s232, 2
        %s236 = sadd.s32 %s234, %s235
        %s237 = scalar_lea.vmem %s1, %s236
        %s238 = smul.u32 2, %s25
        %s239 = smul.u32 2, %s25
        %v240 = vld [vmem:[%s198] sm:$0xff]
        %v241 = vld [vmem:[%s237] sm:$0x3]
        %v242 = vld [vmem:[%s2] sm:$0xf]
        %v244 = vlaneseq
        %v245 = vshrl.u32 %v244, 7
        %v246 = vsub.s32 0, %v245
        %v247 = vrot.slane %v241, %v246
        %v248 = vlaneseq
        %v249 = vshrl.u32 %v248, 7
        %v250 = vsub.s32 1, %v249
        %v251 = vrot.slane %v241, %v250
        %255 = vset.pattern.permute.xlu0 0
        %256 = vperm.xlu0 %255, %v242
        %v257 = vpop.permute.xlu0 %256
        %v259 = vmul.f32 %v247, %v257
        %v260 = vmul.f32 %v251, %v257
        %v263 = vcombine.low %v259, %v260
        %v265 = vadd.f32 %v240, %v263
        %266 = vst [vmem:[%s228] sm:$0xff] %v265
        %s267 = sand.u32 %s119, 1
        %s268 = scalar_lea.sflag [#allocation4], %s267
        %s269 = sand.u32 %s119, 1
        %s270 = smul.addr %s269, 8
        %s271 = scalar_lea.vmem [#allocation5], %s270
        // Predicated region
        $region37: #{tpu_custom_call.1} parent=31 // pred_check
          %p272 = pneg %p129
        $region38: #{tpu_custom_call.1} parent=31 // pred_check_branch
          %274 = sbr.rel (%p272) target = $region40
        $region39: #{tpu_custom_call.1} parent=31 // pred_region
          %s275 = smul.u32 2, %s25
          %s277 = ssub.s32 128, 128
          %278 = vsyncadd %s268, %s277
          %s279 = smul.addr %s24, 2
          %s280 = sadd.s32 %s275, %s279
          %s281 = smul.addr %s280, 64
          %s282 = scalar_lea.hbm %s3, %s281
          %s284 = sshll.u32 %s271, 4
          %s285 = int_to_ptr.vmem [resolvable:$true] %s284
          %287 = dma.vmem_to_hbm [thread:$0]  %s285, 128, %s282, %s268
        $region40: #{tpu_custom_call.1} parent=31 // pred_fallthru
          _
      $region32: #{tpu_custom_call.1} parent=5 // pred_fallthru
        _
      %p288 = scmp.le.s32.totalorder 2, %s15
      // Predicated region
      $region41: #{tpu_custom_call.1} parent=5 // pred_check
        %p289 = pneg %p288
      $region42: #{tpu_custom_call.1} parent=5 // pred_check_branch
        %291 = sbr.rel (%p289) target = $region44
      $region43: #{tpu_custom_call.1} parent=5 // pred_region
        %s292 = ssub.s32 %s15, 2
        // Predicated region
        $region45: #{tpu_custom_call.1} parent=43 // pred_check
          %p293 = pneg %p135
        $region46: #{tpu_custom_call.1} parent=43 // pred_check_branch
          %295 = sbr.rel (%p293) target = $region48
        $region47: #{tpu_custom_call.1} parent=43 // pred_region
          %s296 = sand.u32 %s120, 1
          %s297 = scalar_lea.sflag [#allocation4], %s296
          %s298 = sand.u32 %s120, 1
          %s299 = smul.addr %s298, 8
          %s300 = scalar_lea.vmem [#allocation5], %s299
          %301 = dma.done %s297, 128
        $region48: #{tpu_custom_call.1} parent=43 // pred_fallthru
          _
      $region44: #{tpu_custom_call.1} parent=5 // pred_fallthru
        _
    $region6: #{tpu_custom_call.1} parent=1 // loop_footer
      %s19 = sadd.s32 1, %s15
    $region7: #{tpu_custom_call.1} parent=1 // loop_footer_branch
      %14 = sbr.rel target = $region3
    $region8: #{tpu_custom_call.1} parent=1 // loop_exit
      _
    %302 = vsyncpa [#allocation3], 1
    %s303 = scalar_lea.sflag [#allocation3], 1
    %304 = vsyncpa %s303, 1
    %305 = vsyncpa [#allocation4], 1
    %s306 = scalar_lea.sflag [#allocation4], 1
    %307 = vsyncpa %s306, 1

</llo_original>
